<compile_context>
chip_gen: v7x
topology: tpu7x:2x2x1
jax: 0.10.0
libtpu: 0.0.40
codegen_flags: <defaults>
</compile_context>

<pallas_src>
import functools

import jax
import jax.numpy as jnp
from jax import lax
from jax.experimental import pallas as pl
from jax.experimental.pallas import tpu as pltpu


def _triplet_kernel(xr_ref, xcT_ref, sqc_ref, sqr_ref, cnt_ref, tc_ref, tr_ref,
                    loss_ref, psum_ref, tsum_ref, minp_ref, maxp_ref, minn_ref,
                    *, margin, n_total):
    # xr_ref : (tm, d_pad)  row block of features (native dtype)
    # xcT_ref: (d_pad, tn)  column block of pre-transposed features
    # sqc_ref: (tm, 1) f32  ||x_i||^2 for the row block (hoisted)
    # sqr_ref: (1, tn) f32  ||x_j||^2 for the column block (hoisted)
    # cnt_ref: (tm, 1) f32  #positives per row incl. self (hoisted)
    # tc_ref : (tm, 1) i32 / tr_ref: (1, tn) i32  labels
    j = pl.program_id(1)

    @pl.when(j == 0)
    def _init():
        psum_ref[...] = jnp.zeros(psum_ref.shape, psum_ref.dtype)
        tsum_ref[...] = jnp.zeros(tsum_ref.shape, tsum_ref.dtype)
        minp_ref[...] = jnp.full(minp_ref.shape, jnp.inf, minp_ref.dtype)
        maxp_ref[...] = jnp.zeros(maxp_ref.shape, maxp_ref.dtype)  # positives >= 1e-12 > 0
        minn_ref[...] = jnp.full(minn_ref.shape, jnp.inf, minn_ref.dtype)

    # Canonical (tm,K)x(K,N) Gram block on the MXU, f32 accumulation.
    gram = lax.dot_general(xr_ref[...], xcT_ref[...], (((1,), (0,)), ((), ())),
                           preferred_element_type=jnp.float32)            # (tm, tn)

    # Squared distances from the hoisted norms (torch clamps at 1e-12 before
    # sqrt; the sqrt/square roundtrip is an ulp-level no-op).
    sqd = jnp.maximum(sqc_ref[...] + sqr_ref[...] - 2.0 * gram, 1e-12)     # (tm, tn)
    mask = tc_ref[...] == tr_ref[...]                                      # (tm, tn)
    pos = jnp.where(mask, sqd, 0.0)

    # Plain row sums on the (otherwise idle) MXU instead of XLU lane reduces.
    tn = gram.shape[1]
    ones_n = jnp.ones((tn, 1), jnp.float32)
    dims = (((1,), (0,)), ((), ()))
    psum_ref[...] += lax.dot_general(pos, ones_n, dims, preferred_element_type=jnp.float32)
    tsum_ref[...] += lax.dot_general(sqd, ones_n, dims, preferred_element_type=jnp.float32)

    # Only min/max need dedicated masked XLU reduces.
    minp_ref[...] = jnp.minimum(
        minp_ref[...], jnp.min(jnp.where(mask, sqd, jnp.inf), axis=1, keepdims=True))
    maxp_ref[...] = jnp.maximum(maxp_ref[...], jnp.max(pos, axis=1, keepdims=True))
    minn_ref[...] = jnp.minimum(
        minn_ref[...], jnp.min(jnp.where(mask, jnp.inf, sqd), axis=1, keepdims=True))

    @pl.when(j == pl.num_programs(1) - 1)
    def _finalize():
        cnt_p = cnt_ref[...]
        cnt_n = jnp.float32(n_total) - cnt_p
        # Positives: drop the single smallest squared distance (the self
        # distance when the row has >=2 same-label samples), then mean.
        sigma_p = (psum_ref[...] - minp_ref[...]) / (cnt_p - 1.0)
        dist_ap = maxp_ref[...] / sigma_p + 0.5 * jnp.log(sigma_p)
        sigma_n = (tsum_ref[...] - psum_ref[...]) / cnt_n
        dist_an = minn_ref[...] / sigma_n + 0.5 * jnp.log(sigma_n)
        if margin == 0.0:
            # SoftMarginLoss(dist_an - dist_ap, y=1) == softplus(dist_ap - dist_an),
            # computed in the overflow-stable form.
            z = dist_ap - dist_an
            per_row = jnp.maximum(z, 0.0) + jnp.log1p(jnp.exp(-jnp.abs(z)))
        else:
            # MarginRankingLoss(dist_an, dist_ap, y=1)
            per_row = jnp.maximum(dist_ap - dist_an + margin, 0.0)
        loss_ref[...] = per_row


def _vmem_capacity_bytes():
    try:
        cap = int(getattr(pltpu.get_tpu_info(), "vmem_capacity_bytes"))
        if cap > 0:
            return cap
    except Exception:
        pass
    return 64 << 20  # conservative (v7x-sized) fallback


def _mxu_k_align():
    # v6e / v7x MXUs are 2x256x256 -> pad K to 256; v5e and older are 128-wide.
    try:
        kind = jax.devices()[0].device_kind.lower()
        if ("v6" in kind) or ("v7" in kind):
            return 256
    except Exception:
        pass
    return 128


def _pick_tile(n, cands):
    for c in cands:
        if c <= n and n % c == 0:
            return c
    return n  # odd sizes fall back to a single full-extent tile


def _vmem_estimate(tm, tn, d_pad, itemsize):
    col_blk = tm * 128 * 4            # (tm, 1) block, padded to a full lane
    row_blk = 8 * tn * 4              # (1, tn) block, padded to 8 sublanes
    return int(2 * tm * d_pad * itemsize      # x row block (double-buffered)
               + 2 * d_pad * tn * itemsize    # x.T column block (double-buffered)
               + 2 * 3 * col_blk              # sq_col, cnt_col, t_col
               + 2 * 2 * row_blk              # sq_row, t_row
               + 2 * col_blk                  # output block
               + 5 * col_blk                  # scratch accumulators
               + 10 * tm * tn * 4             # (tm, tn) f32/bool temporaries
               + (4 << 20))                   # slack


def triplet_loss(inputs, targets, margin=0.3, *, row_tile=None, col_tile=None):
    """inputs: (n, feat_dim) float (f32 or bf16), targets: (n,) int labels. Returns scalar loss."""
    n, d = inputs.shape
    itemsize = jnp.dtype(inputs.dtype).itemsize

    # Zero-pad the feature dim (K) to the MXU-friendly multiple; zero columns
    # leave the Gram and the norms unchanged.
    k_align = _mxu_k_align()
    d_pad = ((d + k_align - 1) // k_align) * k_align
    x = inputs if d_pad == d else jnp.pad(inputs, ((0, 0), (0, d_pad - d)))
    xT = x.T  # (d_pad, n): one-time HBM transpose -> canonical (M,K)x(K,N) in-kernel

    # Hoisted per-sample statistics (one-time O(n*d) / O(n^2) XLA work).
    xf = inputs.astype(jnp.float32)
    sq = jnp.sum(xf * xf, axis=1)                       # ||x_i||^2 in f32
    sq_col = sq.reshape(n, 1)
    sq_row = sq.reshape(1, n)
    t = targets.astype(jnp.int32)
    t_col = t.reshape(n, 1)
    t_row = t.reshape(1, n)
    cnt_col = jnp.sum((t_col == t_row).astype(jnp.float32), axis=1, keepdims=True)

    vmem_cap = _vmem_capacity_bytes()
    budget = int(vmem_cap * 0.85)

    # Row tile: up to 256 on 128 MiB parts (v5e/v6e), capped at 128 on v7x.
    tm_cands = (256, 128, 64, 32, 16, 8) if vmem_cap > (96 << 20) else (128, 64, 32, 16, 8)
    tm = int(row_tile) if (row_tile is not None and n % row_tile == 0) else _pick_tile(n, tm_cands)

    if col_tile is not None and n % col_tile == 0:
        tn_opts = [int(col_tile)]
    else:
        tn_opts = [c for c in (2048, 1024, 512, 256, 128) if c <= n and n % c == 0] or [n]
    tn = tn_opts[0]
    while _vmem_estimate(tm, tn, d_pad, itemsize) > budget and len(tn_opts) > 1:
        tn_opts.pop(0)
        tn = tn_opts[0]
    while (row_tile is None and _vmem_estimate(tm, tn, d_pad, itemsize) > budget
           and tm > 8 and tm % 2 == 0 and n % (tm // 2) == 0):
        tm //= 2

    vmem_limit = int(min(max(_vmem_estimate(tm, tn, d_pad, itemsize), 32 << 20),
                         int(vmem_cap * 0.9)))

    grid = (n // tm, n // tn)

    cost = pl.CostEstimate(
        flops=int(2 * n * n * d_pad + 16 * n * n),
        transcendentals=int(3 * n),
        bytes_accessed=int((n // tm) * n * d_pad * itemsize
                           + n * d_pad * itemsize + 8 * n * 4),
    )

    per_row = pl.pallas_call(
        functools.partial(_triplet_kernel, margin=float(margin), n_total=int(n)),
        out_shape=jax.ShapeDtypeStruct((n, 1), jnp.float32),
        grid=grid,
        in_specs=[
            pl.BlockSpec((tm, d_pad), lambda i, j: (i, 0)),   # x row block
            pl.BlockSpec((d_pad, tn), lambda i, j: (0, j)),   # x.T column block
            pl.BlockSpec((tm, 1), lambda i, j: (i, 0)),       # ||x||^2 (rows)
            pl.BlockSpec((1, tn), lambda i, j: (0, j)),       # ||x||^2 (cols)
            pl.BlockSpec((tm, 1), lambda i, j: (i, 0)),       # positive counts
            pl.BlockSpec((tm, 1), lambda i, j: (i, 0)),       # labels (rows)
            pl.BlockSpec((1, tn), lambda i, j: (0, j)),       # labels (cols)
        ],
        out_specs=pl.BlockSpec((tm, 1), lambda i, j: (i, 0)),
        scratch_shapes=[pltpu.VMEM((tm, 1), jnp.float32) for _ in range(5)],
        compiler_params=pltpu.CompilerParams(
            dimension_semantics=("parallel", "arbitrary"),
            vmem_limit_bytes=vmem_limit,
        ),
        cost_estimate=cost,
    )(x, xT, sq_col, sq_row, cnt_col, t_col, t_row)

    return jnp.sum(per_row) / jnp.float32(n)


def _reference(inputs, targets, margin=0.3):
    """Pure-JAX reference mirroring the torch module (incl. sqrt-then-square)."""
    x = inputs.astype(jnp.float32)
    sq = jnp.sum(x * x, axis=1, keepdims=True)
    d2 = jnp.maximum(sq + sq.T - 2.0 * (x @ x.T), 1e-12)
    dist = jnp.sqrt(d2)
    sqd = dist * dist
    mask = targets[:, None] == targets[None, :]

    pos_sum = jnp.sum(jnp.where(mask, sqd, 0.0), axis=1)
    min_p = jnp.min(jnp.where(mask, sqd, jnp.inf), axis=1)
    max_p = jnp.max(jnp.where(mask, sqd, -jnp.inf), axis=1)
    cnt_p = jnp.sum(mask.astype(jnp.float32), axis=1)
    sigma_p = (pos_sum - min_p) / (cnt_p - 1.0)
    dist_ap = max_p / sigma_p + 0.5 * jnp.log(sigma_p)

    nmask = ~mask
    neg_sum = jnp.sum(jnp.where(nmask, sqd, 0.0), axis=1)
    min_n = jnp.min(jnp.where(nmask, sqd, jnp.inf), axis=1)
    cnt_n = jnp.sum(nmask.astype(jnp.float32), axis=1)
    sigma_n = neg_sum / cnt_n
    dist_an = min_n / sigma_n + 0.5 * jnp.log(sigma_n)

    if margin == 0.0:
        return jnp.mean(jnp.log1p(jnp.exp(-(dist_an - dist_ap))))
    return jnp.mean(jnp.maximum(dist_ap - dist_an + margin, 0.0))


if __name__ == "__main__":
    key = jax.random.PRNGKey(0)
    k0, k1, k2 = jax.random.split(key, 3)

    # Tiny case: batch of 8 features, feat_dim 32, 4 classes x 2 samples.
    n, d = 8, 32
    inputs = jax.random.normal(k0, (n, d), dtype=jnp.float32)
    targets = jnp.array([0, 0, 1, 1, 2, 2, 3, 3], dtype=jnp.int32)

    # margin != 0 path (MarginRankingLoss)
    loss = triplet_loss(inputs, targets, margin=0.3)
    jax.block_until_ready(loss)
    ref = _reference(inputs, targets, margin=0.3)
    assert jnp.isfinite(loss), "loss is not finite"
    assert jnp.allclose(loss, ref, rtol=1e-3, atol=1e-4), (loss, ref)

    # margin == 0 path (SoftMarginLoss, stable softplus in-kernel)
    loss0 = triplet_loss(inputs, targets, margin=0.0)
    jax.block_until_ready(loss0)
    ref0 = _reference(inputs, targets, margin=0.0)
    assert jnp.isfinite(loss0), "margin=0 loss is not finite"
    assert jnp.allclose(loss0, ref0, rtol=1e-3, atol=1e-4), (loss0, ref0)

    # bf16 feature path: Gram runs on the bf16 MXU path, elementwise math in f32.
    loss_bf16 = triplet_loss(inputs.astype(jnp.bfloat16), targets, margin=0.3)
    jax.block_until_ready(loss_bf16)
    assert jnp.isfinite(loss_bf16), "bf16 loss is not finite"

    # Multi-tile case exercising the 2-D grid / column accumulators (grid (2, 2)).
    n2, d2 = 256, 48
    inputs2 = jax.random.normal(k1, (n2, d2), dtype=jnp.float32)
    targets2 = jnp.tile(jnp.arange(64, dtype=jnp.int32), 4)
    targets2 = targets2[jax.random.permutation(k2, n2)]
    loss2 = triplet_loss(inputs2, targets2, margin=0.3, row_tile=128, col_tile=128)
    jax.block_until_ready(loss2)
    ref2 = _reference(inputs2, targets2, margin=0.3)
    assert jnp.isfinite(loss2), "multi-tile loss is not finite"
    assert jnp.allclose(loss2, ref2, rtol=1e-3, atol=1e-4), (loss2, ref2)

    print("KERNEL_OK")
</pallas_src>

<mosaic_0001>
module attributes {stable_mosaic.version = 11 : i64} {
  func.func @_triplet_kernel(%arg0: i32, %arg1: i32, %arg2: memref<8x128xf32, #tpu.memory_space<vmem>>, %arg3: memref<128x8xf32, #tpu.memory_space<vmem>>, %arg4: memref<8x1xf32, #tpu.memory_space<vmem>>, %arg5: memref<1x8xf32, #tpu.memory_space<vmem>>, %arg6: memref<8x1xf32, #tpu.memory_space<vmem>>, %arg7: memref<8x1xi32, #tpu.memory_space<vmem>>, %arg8: memref<1x8xi32, #tpu.memory_space<vmem>>, %arg9: memref<8x1xf32, #tpu.memory_space<vmem>>, %arg10: memref<8x1xf32, #tpu.memory_space<vmem>>, %arg11: memref<8x1xf32, #tpu.memory_space<vmem>>, %arg12: memref<8x1xf32, #tpu.memory_space<vmem>>, %arg13: memref<8x1xf32, #tpu.memory_space<vmem>>, %arg14: memref<8x1xf32, #tpu.memory_space<vmem>>) attributes {dimension_semantics = [#tpu.dimension_semantics<parallel>, #tpu.dimension_semantics<arbitrary>], iteration_bounds = array<i64: 1, 1>, scalar_prefetch = 0 : i64, scratch_operands = 5 : i64, tpu.core_type = #tpu.core_type<tc>, window_params = [{transform_indices = @transform_0, window_bounds = array<i64: 8, 128>}, {transform_indices = @transform_1, window_bounds = array<i64: 128, 8>}, {transform_indices = @transform_2, window_bounds = array<i64: 8, 1>}, {transform_indices = @transform_3, window_bounds = array<i64: 1, 8>}, {transform_indices = @transform_4, window_bounds = array<i64: 8, 1>}, {transform_indices = @transform_5, window_bounds = array<i64: 8, 1>}, {transform_indices = @transform_6, window_bounds = array<i64: 1, 8>}, {transform_indices = @transform_7, window_bounds = array<i64: 8, 1>}]} {
    %c0_i32 = arith.constant 0 : i32
    %0 = arith.cmpi eq, %arg1, %c0_i32 : i32
    %1 = arith.extui %0 : i1 to i32
    %c0_i32_0 = arith.constant 0 : i32
    %2 = arith.cmpi ne, %1, %c0_i32_0 : i32
    scf.if %2 {
      %cst_45 = arith.constant 0.000000e+00 : f32
      %54 = vector.broadcast %cst_45 : f32 to vector<8x1xf32>
      %c0_46 = arith.constant 0 : index
      %c0_47 = arith.constant 0 : index
      %55 = vector.load %arg10[%c0_46, %c0_47] : memref<8x1xf32, #tpu.memory_space<vmem>>, vector<8x1xf32>
      tpu.vector_store %arg10[%c0_46, %c0_47], %54 {strides = array<i32>} : memref<8x1xf32, #tpu.memory_space<vmem>>, vector<8x1xf32>,
      %cst_48 = arith.constant 0.000000e+00 : f32
      %56 = vector.broadcast %cst_48 : f32 to vector<8x1xf32>
      %c0_49 = arith.constant 0 : index
      %c0_50 = arith.constant 0 : index
      %57 = vector.load %arg11[%c0_49, %c0_50] : memref<8x1xf32, #tpu.memory_space<vmem>>, vector<8x1xf32>
      tpu.vector_store %arg11[%c0_49, %c0_50], %56 {strides = array<i32>} : memref<8x1xf32, #tpu.memory_space<vmem>>, vector<8x1xf32>,
      %cst_51 = arith.constant 0x7F800000 : f32
      %58 = vector.broadcast %cst_51 : f32 to vector<8x1xf32>
      %c0_52 = arith.constant 0 : index
      %c0_53 = arith.constant 0 : index
      %59 = vector.load %arg12[%c0_52, %c0_53] : memref<8x1xf32, #tpu.memory_space<vmem>>, vector<8x1xf32>
      tpu.vector_store %arg12[%c0_52, %c0_53], %58 {strides = array<i32>} : memref<8x1xf32, #tpu.memory_space<vmem>>, vector<8x1xf32>,
      %cst_54 = arith.constant 0.000000e+00 : f32
      %60 = vector.broadcast %cst_54 : f32 to vector<8x1xf32>
      %c0_55 = arith.constant 0 : index
      %c0_56 = arith.constant 0 : index
      %61 = vector.load %arg13[%c0_55, %c0_56] : memref<8x1xf32, #tpu.memory_space<vmem>>, vector<8x1xf32>
      tpu.vector_store %arg13[%c0_55, %c0_56], %60 {strides = array<i32>} : memref<8x1xf32, #tpu.memory_space<vmem>>, vector<8x1xf32>,
      %cst_57 = arith.constant 0x7F800000 : f32
      %62 = vector.broadcast %cst_57 : f32 to vector<8x1xf32>
      %c0_58 = arith.constant 0 : index
      %c0_59 = arith.constant 0 : index
      %63 = vector.load %arg14[%c0_58, %c0_59] : memref<8x1xf32, #tpu.memory_space<vmem>>, vector<8x1xf32>
      tpu.vector_store %arg14[%c0_58, %c0_59], %62 {strides = array<i32>} : memref<8x1xf32, #tpu.memory_space<vmem>>, vector<8x1xf32>,
    } else {
    }
    %c0 = arith.constant 0 : index
    %c0_1 = arith.constant 0 : index
    %3 = vector.load %arg2[%c0, %c0_1] : memref<8x128xf32, #tpu.memory_space<vmem>>, vector<8x128xf32>
    %c0_2 = arith.constant 0 : index
    %c0_3 = arith.constant 0 : index
    %4 = vector.load %arg3[%c0_2, %c0_3] : memref<128x8xf32, #tpu.memory_space<vmem>>, vector<128x8xf32>
    %cst = arith.constant dense<0.000000e+00> : vector<8x8xf32>
    %5 = tpu.matmul %3, %4, %cst {dimension_numbers = #tpu.dot_dimension_numbers<[1], [0], [0], [1], [0, 0, 1, 1], [], []>} : vector<8x128xf32>, vector<128x8xf32>, vector<8x8xf32> -> vector<8x8xf32>
    %c0_4 = arith.constant 0 : index
    %c0_5 = arith.constant 0 : index
    %6 = vector.load %arg4[%c0_4, %c0_5] : memref<8x1xf32, #tpu.memory_space<vmem>>, vector<8x1xf32>
    %c0_6 = arith.constant 0 : index
    %c0_7 = arith.constant 0 : index
    %7 = vector.load %arg5[%c0_6, %c0_7] : memref<1x8xf32, #tpu.memory_space<vmem>>, vector<1x8xf32>
    %8 = vector.broadcast %6 : vector<8x1xf32> to vector<8x8xf32>
    %9 = vector.broadcast %7 : vector<1x8xf32> to vector<8x8xf32>
    %10 = arith.addf %8, %9 : vector<8x8xf32>
    %cst_8 = arith.constant 2.000000e+00 : f32
    %11 = vector.broadcast %cst_8 : f32 to vector<8x8xf32>
    %12 = arith.mulf %11, %5 : vector<8x8xf32>
    %13 = arith.subf %10, %12 : vector<8x8xf32>
    %cst_9 = arith.constant 9.99999996E-13 : f32
    %14 = vector.broadcast %cst_9 : f32 to vector<8x8xf32>
    %15 = arith.maximumf %13, %14 : vector<8x8xf32>
    %c0_10 = arith.constant 0 : index
    %c0_11 = arith.constant 0 : index
    %16 = vector.load %arg7[%c0_10, %c0_11] : memref<8x1xi32, #tpu.memory_space<vmem>>, vector<8x1xi32>
    %c0_12 = arith.constant 0 : index
    %c0_13 = arith.constant 0 : index
    %17 = vector.load %arg8[%c0_12, %c0_13] : memref<1x8xi32, #tpu.memory_space<vmem>>, vector<1x8xi32>
    %18 = vector.broadcast %16 : vector<8x1xi32> to vector<8x8xi32>
    %19 = vector.broadcast %17 : vector<1x8xi32> to vector<8x8xi32>
    %20 = arith.cmpi eq, %18, %19 : vector<8x8xi32>
    %cst_14 = arith.constant 0.000000e+00 : f32
    %21 = vector.broadcast %cst_14 : f32 to vector<8x8xf32>
    %22 = arith.select %20, %15, %21 : vector<8x8xi1>, vector<8x8xf32>
    %cst_15 = arith.constant 1.000000e+00 : f32
    %23 = vector.broadcast %cst_15 : f32 to vector<8x1xf32>
    %c0_16 = arith.constant 0 : index
    %c0_17 = arith.constant 0 : index
    %24 = vector.load %arg10[%c0_16, %c0_17] : memref<8x1xf32, #tpu.memory_space<vmem>>, vector<8x1xf32>
    %cst_18 = arith.constant dense<0.000000e+00> : vector<8x1xf32>
    %25 = tpu.matmul %22, %23, %cst_18 {dimension_numbers = #tpu.dot_dimension_numbers<[1], [0], [0], [1], [0, 0, 1, 1], [], []>} : vector<8x8xf32>, vector<8x1xf32>, vector<8x1xf32> -> vector<8x1xf32>
    %26 = arith.addf %24, %25 : vector<8x1xf32>
    %c0_19 = arith.constant 0 : index
    %c0_20 = arith.constant 0 : index
    %27 = vector.load %arg10[%c0_19, %c0_20] : memref<8x1xf32, #tpu.memory_space<vmem>>, vector<8x1xf32>
    tpu.vector_store %arg10[%c0_19, %c0_20], %26 {strides = array<i32>} : memref<8x1xf32, #tpu.memory_space<vmem>>, vector<8x1xf32>,
    %c0_21 = arith.constant 0 : index
    %c0_22 = arith.constant 0 : index
    %28 = vector.load %arg11[%c0_21, %c0_22] : memref<8x1xf32, #tpu.memory_space<vmem>>, vector<8x1xf32>
    %cst_23 = arith.constant dense<0.000000e+00> : vector<8x1xf32>
    %29 = tpu.matmul %15, %23, %cst_23 {dimension_numbers = #tpu.dot_dimension_numbers<[1], [0], [0], [1], [0, 0, 1, 1], [], []>} : vector<8x8xf32>, vector<8x1xf32>, vector<8x1xf32> -> vector<8x1xf32>
    %30 = arith.addf %28, %29 : vector<8x1xf32>
    %c0_24 = arith.constant 0 : index
    %c0_25 = arith.constant 0 : index
    %31 = vector.load %arg11[%c0_24, %c0_25] : memref<8x1xf32, #tpu.memory_space<vmem>>, vector<8x1xf32>
    tpu.vector_store %arg11[%c0_24, %c0_25], %30 {strides = array<i32>} : memref<8x1xf32, #tpu.memory_space<vmem>>, vector<8x1xf32>,
    %c0_26 = arith.constant 0 : index
    %c0_27 = arith.constant 0 : index
    %32 = vector.load %arg12[%c0_26, %c0_27] : memref<8x1xf32, #tpu.memory_space<vmem>>, vector<8x1xf32>
    %cst_28 = arith.constant 0x7F800000 : f32
    %33 = vector.broadcast %cst_28 : f32 to vector<8x8xf32>
    %34 = arith.select %20, %15, %33 : vector<8x8xi1>, vector<8x8xf32>
    %cst_29 = arith.constant dense<0x7F800000> : vector<8xf32>
    %35 = vector.multi_reduction <minimumf>, %34, %cst_29 [1] : vector<8x8xf32> to vector<8xf32>
    %36 = vector.shape_cast %35 : vector<8xf32> to vector<8x1xf32>
    %37 = arith.minimumf %32, %36 : vector<8x1xf32>
    %c0_30 = arith.constant 0 : index
    %c0_31 = arith.constant 0 : index
    %38 = vector.load %arg12[%c0_30, %c0_31] : memref<8x1xf32, #tpu.memory_space<vmem>>, vector<8x1xf32>
    tpu.vector_store %arg12[%c0_30, %c0_31], %37 {strides = array<i32>} : memref<8x1xf32, #tpu.memory_space<vmem>>, vector<8x1xf32>,
    %c0_32 = arith.constant 0 : index
    %c0_33 = arith.constant 0 : index
    %39 = vector.load %arg13[%c0_32, %c0_33] : memref<8x1xf32, #tpu.memory_space<vmem>>, vector<8x1xf32>
    %cst_34 = arith.constant dense<0xFF800000> : vector<8xf32>
    %40 = vector.multi_reduction <maximumf>, %22, %cst_34 [1] : vector<8x8xf32> to vector<8xf32>
    %41 = vector.shape_cast %40 : vector<8xf32> to vector<8x1xf32>
    %42 = arith.maximumf %39, %41 : vector<8x1xf32>
    %c0_35 = arith.constant 0 : index
    %c0_36 = arith.constant 0 : index
    %43 = vector.load %arg13[%c0_35, %c0_36] : memref<8x1xf32, #tpu.memory_space<vmem>>, vector<8x1xf32>
    tpu.vector_store %arg13[%c0_35, %c0_36], %42 {strides = array<i32>} : memref<8x1xf32, #tpu.memory_space<vmem>>, vector<8x1xf32>,
    %c0_37 = arith.constant 0 : index
    %c0_38 = arith.constant 0 : index
    %44 = vector.load %arg14[%c0_37, %c0_38] : memref<8x1xf32, #tpu.memory_space<vmem>>, vector<8x1xf32>
    %cst_39 = arith.constant 0x7F800000 : f32
    %45 = vector.broadcast %cst_39 : f32 to vector<8x8xf32>
    %46 = arith.select %20, %45, %15 : vector<8x8xi1>, vector<8x8xf32>
    %cst_40 = arith.constant dense<0x7F800000> : vector<8xf32>
    %47 = vector.multi_reduction <minimumf>, %46, %cst_40 [1] : vector<8x8xf32> to vector<8xf32>
    %48 = vector.shape_cast %47 : vector<8xf32> to vector<8x1xf32>
    %49 = arith.minimumf %44, %48 : vector<8x1xf32>
    %c0_41 = arith.constant 0 : index
    %c0_42 = arith.constant 0 : index
    %50 = vector.load %arg14[%c0_41, %c0_42] : memref<8x1xf32, #tpu.memory_space<vmem>>, vector<8x1xf32>
    tpu.vector_store %arg14[%c0_41, %c0_42], %49 {strides = array<i32>} : memref<8x1xf32, #tpu.memory_space<vmem>>, vector<8x1xf32>,
    %c0_i32_43 = arith.constant 0 : i32
    %51 = arith.cmpi eq, %arg1, %c0_i32_43 : i32
    %52 = arith.extui %51 : i1 to i32
    %c0_i32_44 = arith.constant 0 : i32
    %53 = arith.cmpi ne, %52, %c0_i32_44 : i32
    scf.if %53 {
      %c0_45 = arith.constant 0 : index
      %c0_46 = arith.constant 0 : index
      %54 = vector.load %arg6[%c0_45, %c0_46] : memref<8x1xf32, #tpu.memory_space<vmem>>, vector<8x1xf32>
      %cst_47 = arith.constant 8.000000e+00 : f32
      %55 = vector.broadcast %cst_47 : f32 to vector<8x1xf32>
      %56 = arith.subf %55, %54 : vector<8x1xf32>
      %c0_48 = arith.constant 0 : index
      %c0_49 = arith.constant 0 : index
      %57 = vector.load %arg10[%c0_48, %c0_49] : memref<8x1xf32, #tpu.memory_space<vmem>>, vector<8x1xf32>
      %c0_50 = arith.constant 0 : index
      %c0_51 = arith.constant 0 : index
      %58 = vector.load %arg12[%c0_50, %c0_51] : memref<8x1xf32, #tpu.memory_space<vmem>>, vector<8x1xf32>
      %59 = arith.subf %57, %58 : vector<8x1xf32>
      %cst_52 = arith.constant 1.000000e+00 : f32
      %60 = vector.broadcast %cst_52 : f32 to vector<8x1xf32>
      %61 = arith.subf %54, %60 : vector<8x1xf32>
      %62 = arith.divf %59, %61 : vector<8x1xf32>
      %c0_53 = arith.constant 0 : index
      %c0_54 = arith.constant 0 : index
      %63 = vector.load %arg13[%c0_53, %c0_54] : memref<8x1xf32, #tpu.memory_space<vmem>>, vector<8x1xf32>
      %64 = arith.divf %63, %62 : vector<8x1xf32>
      %65 = math.log %62 : vector<8x1xf32>
      %cst_55 = arith.constant 5.000000e-01 : f32
      %66 = vector.broadcast %cst_55 : f32 to vector<8x1xf32>
      %67 = arith.mulf %66, %65 : vector<8x1xf32>
      %68 = arith.addf %64, %67 : vector<8x1xf32>
      %c0_56 = arith.constant 0 : index
      %c0_57 = arith.constant 0 : index
      %69 = vector.load %arg11[%c0_56, %c0_57] : memref<8x1xf32, #tpu.memory_space<vmem>>, vector<8x1xf32>
      %c0_58 = arith.constant 0 : index
      %c0_59 = arith.constant 0 : index
      %70 = vector.load %arg10[%c0_58, %c0_59] : memref<8x1xf32, #tpu.memory_space<vmem>>, vector<8x1xf32>
      %71 = arith.subf %69, %70 : vector<8x1xf32>
      %72 = arith.divf %71, %56 : vector<8x1xf32>
      %c0_60 = arith.constant 0 : index
      %c0_61 = arith.constant 0 : index
      %73 = vector.load %arg14[%c0_60, %c0_61] : memref<8x1xf32, #tpu.memory_space<vmem>>, vector<8x1xf32>
      %74 = arith.divf %73, %72 : vector<8x1xf32>
      %75 = math.log %72 : vector<8x1xf32>
      %cst_62 = arith.constant 5.000000e-01 : f32
      %76 = vector.broadcast %cst_62 : f32 to vector<8x1xf32>
      %77 = arith.mulf %76, %75 : vector<8x1xf32>
      %78 = arith.addf %74, %77 : vector<8x1xf32>
      %79 = arith.subf %68, %78 : vector<8x1xf32>
      %cst_63 = arith.constant 3.000000e-01 : f32
      %80 = vector.broadcast %cst_63 : f32 to vector<8x1xf32>
      %81 = arith.addf %79, %80 : vector<8x1xf32>
      %cst_64 = arith.constant 0.000000e+00 : f32
      %82 = vector.broadcast %cst_64 : f32 to vector<8x1xf32>
      %83 = arith.maximumf %81, %82 : vector<8x1xf32>
      %c0_65 = arith.constant 0 : index
      %c0_66 = arith.constant 0 : index
      %84 = vector.load %arg9[%c0_65, %c0_66] : memref<8x1xf32, #tpu.memory_space<vmem>>, vector<8x1xf32>
      tpu.vector_store %arg9[%c0_65, %c0_66], %83 {strides = array<i32>} : memref<8x1xf32, #tpu.memory_space<vmem>>, vector<8x1xf32>,
    } else {
    }
    return
  }
  func.func @transform_0(%arg0: i32, %arg1: i32) -> (i32, i32) {
    %c0_i32 = arith.constant 0 : i32
    %c0_i32_0 = arith.constant 0 : i32
    return %arg0, %c0_i32 : i32, i32
  }
  func.func @transform_1(%arg0: i32, %arg1: i32) -> (i32, i32) {
    %c0_i32 = arith.constant 0 : i32
    %c0_i32_0 = arith.constant 0 : i32
    return %c0_i32, %arg1 : i32, i32
  }
  func.func @transform_2(%arg0: i32, %arg1: i32) -> (i32, i32) {
    %c0_i32 = arith.constant 0 : i32
    %c0_i32_0 = arith.constant 0 : i32
    return %arg0, %c0_i32 : i32, i32
  }
  func.func @transform_3(%arg0: i32, %arg1: i32) -> (i32, i32) {
    %c0_i32 = arith.constant 0 : i32
    %c0_i32_0 = arith.constant 0 : i32
    return %c0_i32, %arg1 : i32, i32
  }
  func.func @transform_4(%arg0: i32, %arg1: i32) -> (i32, i32) {
    %c0_i32 = arith.constant 0 : i32
    %c0_i32_0 = arith.constant 0 : i32
    return %arg0, %c0_i32 : i32, i32
  }
  func.func @transform_5(%arg0: i32, %arg1: i32) -> (i32, i32) {
    %c0_i32 = arith.constant 0 : i32
    %c0_i32_0 = arith.constant 0 : i32
    return %arg0, %c0_i32 : i32, i32
  }
  func.func @transform_6(%arg0: i32, %arg1: i32) -> (i32, i32) {
    %c0_i32 = arith.constant 0 : i32
    %c0_i32_0 = arith.constant 0 : i32
    return %c0_i32, %arg1 : i32, i32
  }
  func.func @transform_7(%arg0: i32, %arg1: i32) -> (i32, i32) {
    %c0_i32 = arith.constant 0 : i32
    %c0_i32_0 = arith.constant 0 : i32
    return %arg0, %c0_i32 : i32, i32
  }
}

</mosaic_0001>

<llo_original>
// kernel: tpu_custom_call.1
$region0: #{tpu_custom_call.1}
  #allocation0 [shape = 'u32[]', space=smem, size = 0x4, offset = 0x4, fixed_abs, tag = 'smem constant byte address 0x4 - core index']
  #allocation1 [shape = 'u32[144,128]{1,0:T(1,128)}', space=vmem, size = 0x12000, scoped, tag = 'internal scratch']
  #allocation2 [shape = 'f32[8,1]{1,0:T(8,128)}', space=vmem, size = 0x1000, scoped, tag = 'scratch operand']
  #allocation3 [shape = 'f32[8,1]{1,0:T(8,128)}', space=vmem, size = 0x1000, scoped, tag = 'scratch operand']
  #allocation4 [shape = 'f32[8,1]{1,0:T(8,128)}', space=vmem, size = 0x1000, scoped, tag = 'scratch operand']
  #allocation5 [shape = 'f32[8,1]{1,0:T(8,128)}', space=vmem, size = 0x1000, scoped, tag = 'scratch operand']
  #allocation6 [shape = 'f32[8,1]{1,0:T(8,128)}', space=vmem, size = 0x1000, scoped, tag = 'scratch operand']
  %s0 = inlined_call_operand.vmem [shape: f32[8,128], index: 0, kind: input, shape index: {}]
  %s1 = inlined_call_operand.vmem [shape: f32[128,8], index: 1, kind: input, shape index: {}]
  %s2 = inlined_call_operand.vmem [shape: f32[8,1], index: 2, kind: input, shape index: {}]
  %s3 = inlined_call_operand.vmem [shape: f32[1,8], index: 3, kind: input, shape index: {}]
  %s4 = inlined_call_operand.vmem [shape: f32[8,1], index: 4, kind: input, shape index: {}]
  %s5 = inlined_call_operand.vmem [shape: s32[8,1], index: 5, kind: input, shape index: {}]
  %s6 = inlined_call_operand.vmem [shape: s32[1,8], index: 6, kind: input, shape index: {}]
  %s7 = inlined_call_operand.vmem [shape: f32[8,1], index: 7, kind: output, shape index: {}]
  %s8 = sld [smem:[#allocation0]]
  $region46: #{tpu_custom_call.1} parent=0
    _
  %s10 = ssub.s32 1, %s8
  %s11 = scalar_select 0, %s10, %s8
  // Predicated region
  $region2: #{tpu_custom_call.1} parent=0 // pred_check
    _
  $region3: #{tpu_custom_call.1} parent=0 // pred_check_branch
    %13 = sbr.rel (0) target = $region5
  $region4: #{tpu_custom_call.1} parent=0 // pred_region
    _
  $region5: #{tpu_custom_call.1} parent=0 // pred_fallthru
    _
  // Predicated region
  $region6: #{tpu_custom_call.1} parent=0 // pred_check
    _
  $region7: #{tpu_custom_call.1} parent=0 // pred_check_branch
    %15 = sbr.rel (0) target = $region9
  $region8: #{tpu_custom_call.1} parent=0 // pred_region
    _
  $region9: #{tpu_custom_call.1} parent=0 // pred_fallthru
    _
  // Predicated region
  $region10: #{tpu_custom_call.1} parent=0 // pred_check
    _
  $region11: #{tpu_custom_call.1} parent=0 // pred_check_branch
    %17 = sbr.rel (0) target = $region13
  $region12: #{tpu_custom_call.1} parent=0 // pred_region
    _
  $region13: #{tpu_custom_call.1} parent=0 // pred_fallthru
    _
  // Predicated region
  $region14: #{tpu_custom_call.1} parent=0 // pred_check
    _
  $region15: #{tpu_custom_call.1} parent=0 // pred_check_branch
    %19 = sbr.rel (0) target = $region17
  $region16: #{tpu_custom_call.1} parent=0 // pred_region
    _
  $region17: #{tpu_custom_call.1} parent=0 // pred_fallthru
    _
  // Predicated region
  $region18: #{tpu_custom_call.1} parent=0 // pred_check
    _
  $region19: #{tpu_custom_call.1} parent=0 // pred_check_branch
    %21 = sbr.rel (0) target = $region21
  $region20: #{tpu_custom_call.1} parent=0 // pred_region
    _
  $region21: #{tpu_custom_call.1} parent=0 // pred_fallthru
    _
  // Predicated region
  $region22: #{tpu_custom_call.1} parent=0 // pred_check
    _
  $region23: #{tpu_custom_call.1} parent=0 // pred_check_branch
    %23 = sbr.rel (0) target = $region25
  $region24: #{tpu_custom_call.1} parent=0 // pred_region
    _
  $region25: #{tpu_custom_call.1} parent=0 // pred_fallthru
    _
  // Predicated region
  $region26: #{tpu_custom_call.1} parent=0 // pred_check
    _
  $region27: #{tpu_custom_call.1} parent=0 // pred_check_branch
    %25 = sbr.rel (0) target = $region29
  $region28: #{tpu_custom_call.1} parent=0 // pred_region
    _
  $region29: #{tpu_custom_call.1} parent=0 // pred_fallthru
    _
  %p26 = scmp.eq.s32.totalorder 0, 0
  // Predicated region
  $region30: #{tpu_custom_call.1} parent=0 // pred_check
    %p27 = pneg %p26
  $region31: #{tpu_custom_call.1} parent=0 // pred_check_branch
    %29 = sbr.rel (%p27) target = $region33
  $region32: #{tpu_custom_call.1} parent=0 // pred_region
    %vm30 = vcmask 7168
    %31 = vst.msk [vmem:[#allocation2] sm:$0xff] %vm30, 0.0
    %32 = vst.msk [vmem:[#allocation3] sm:$0xff] %vm30, 0.0
    %33 = vst.msk [vmem:[#allocation4] sm:$0xff] %vm30, inf
    %34 = vst.msk [vmem:[#allocation5] sm:$0xff] %vm30, 0.0
    %35 = vst.msk [vmem:[#allocation6] sm:$0xff] %vm30, inf
  $region33: #{tpu_custom_call.1} parent=0 // pred_fallthru
    _
  %v36 = vld [vmem:[%s0] sm:$0xff]
  %v37 = vld [vmem:[%s1] sm:$0xff]
  %v38 = vld [vmem:[%s1 + $0x8] sm:$0xff]
  %v39 = vld [vmem:[%s1 + $0x10] sm:$0xff]
  %v40 = vld [vmem:[%s1 + $0x18] sm:$0xff]
  %v41 = vld [vmem:[%s1 + $0x20] sm:$0xff]
  %v42 = vld [vmem:[%s1 + $0x28] sm:$0xff]
  %v43 = vld [vmem:[%s1 + $0x30] sm:$0xff]
  %v44 = vld [vmem:[%s1 + $0x38] sm:$0xff]
  %v45 = vld [vmem:[%s1 + $0x40] sm:$0xff]
  %v46 = vld [vmem:[%s1 + $0x48] sm:$0xff]
  %v47 = vld [vmem:[%s1 + $0x50] sm:$0xff]
  %v48 = vld [vmem:[%s1 + $0x58] sm:$0xff]
  %v49 = vld [vmem:[%s1 + $0x60] sm:$0xff]
  %v50 = vld [vmem:[%s1 + $0x68] sm:$0xff]
  %v51 = vld [vmem:[%s1 + $0x70] sm:$0xff]
  %v52 = vld [vmem:[%s1 + $0x78] sm:$0xff]
  %53 = vmatprep.subr.mxu0 0.0
  %54 = vmatpush1.msra.mxu0 %v37
  %55 = vmatprep.subr.mxu0 0.0
  %56 = vmatpush1.msra.mxu0 %v38
  %57 = vmatprep.subr.mxu0 0.0
  %58 = vmatpush1.msra.mxu0 %v39
  %59 = vmatprep.subr.mxu0 0.0
  %60 = vmatpush1.msra.mxu0 %v40
  %61 = vmatprep.subr.mxu0 0.0
  %62 = vmatpush1.msra.mxu0 %v41
  %63 = vmatprep.subr.mxu0 0.0
  %64 = vmatpush1.msra.mxu0 %v42
  %65 = vmatprep.subr.mxu0 0.0
  %66 = vmatpush1.msra.mxu0 %v43
  %67 = vmatprep.subr.mxu0 0.0
  %68 = vmatpush1.msra.mxu0 %v44
  %69 = vmatprep.subr.mxu0 0.0
  %70 = vmatpush1.msra.mxu0 %v45
  %71 = vmatprep.subr.mxu0 0.0
  %72 = vmatpush1.msra.mxu0 %v46
  %73 = vmatprep.subr.mxu0 0.0
  %74 = vmatpush1.msra.mxu0 %v47
  %75 = vmatprep.subr.mxu0 0.0
  %76 = vmatpush1.msra.mxu0 %v48
  %77 = vmatprep.subr.mxu0 0.0
  %78 = vmatpush1.msra.mxu0 %v49
  %79 = vmatprep.subr.mxu0 0.0
  %80 = vmatpush1.msra.mxu0 %v50
  %81 = vmatprep.subr.mxu0 0.0
  %82 = vmatpush1.msra.mxu0 %v51
  %83 = vmatprep.subr.mxu0 0.0
  %84 = vmatpush1.msra.mxu0 %v52
  %85 = vmatprep.subr.mxu0 0.0
  %86 = vmatpush1.msra.mxu0 0.0
  %87 = vmatprep.subr.mxu0 0.0
  %88 = vmatpush1.msra.mxu0 0.0
  %89 = vmatprep.subr.mxu0 0.0
  %90 = vmatpush1.msra.mxu0 0.0
  %91 = vmatprep.subr.mxu0 0.0
  %92 = vmatpush1.msra.mxu0 0.0
  %93 = vmatprep.subr.mxu0 0.0
  %94 = vmatpush1.msra.mxu0 0.0
  %95 = vmatprep.subr.mxu0 0.0
  %96 = vmatpush1.msra.mxu0 0.0
  %97 = vmatprep.subr.mxu0 0.0
  %98 = vmatpush1.msra.mxu0 0.0
  %99 = vmatprep.subr.mxu0 0.0
  %100 = vmatpush1.msra.mxu0 0.0
  %101 = vmatprep.subr.mxu0 0.0
  %102 = vmatpush1.msra.mxu0 0.0
  %103 = vmatprep.subr.mxu0 0.0
  %104 = vmatpush1.msra.mxu0 0.0
  %105 = vmatprep.subr.mxu0 0.0
  %106 = vmatpush1.msra.mxu0 0.0
  %107 = vmatprep.subr.mxu0 0.0
  %108 = vmatpush1.msra.mxu0 0.0
  %109 = vmatprep.subr.mxu0 0.0
  %110 = vmatpush1.msra.mxu0 0.0
  %111 = vmatprep.subr.mxu0 0.0
  %112 = vmatpush1.msra.mxu0 0.0
  %113 = vmatprep.subr.mxu0 0.0
  %114 = vmatpush1.msra.mxu0 0.0
  %115 = vmatprep.subr.mxu0 0.0
  %116 = vmatpush1.msra.mxu0 0.0
  %117 = vmatprep.mubr.f32.mxu0 0.0
  %118 = vmatmul.mubr.f32.gmra.mrb[0].mxu0 %v36
  %v119 = vpop.f32.mrb[0].mxu0
  %v120 = vadd.f32 0.0, %v119
  %v121 = vpop.f32.mrb[0].mxu0
  %122 = vdwg.mxu0
  %v123 = vld [vmem:[%s2] sm:$0xff]
  %v124 = vld [vmem:[%s3] sm:$0x1]
  %126 = vset.pattern.permute.xlu0 0
  %127 = vperm.xlu0 %126, %v123
  %v128 = vpop.permute.xlu0 %127
  %v131 = vlaneseq
  %v132 = vshrl.u32 %v131, 7
  %v133 = vsub.s32 0, %v132
  %v134 = vrot.slane %v124, %v133
  %v136 = vadd.f32 %v128, %v134
  %v137 = vmul.f32 %v120, 2.0
  %v138 = vsub.f32 %v136, %v137
  %v139 = vmax.f32 %v138, 1e-12
  %v140 = vld [vmem:[%s5] sm:$0xff]
  %v141 = vld [vmem:[%s6] sm:$0x1]
  %142 = vset.pattern.permute.xlu0 0
  %143 = vperm.xlu0 %142, %v140
  %v144 = vpop.permute.xlu0 %143
  %v145 = vlaneseq
  %v146 = vshrl.u32 %v145, 7
  %v147 = vsub.s32 0, %v146
  %v148 = vrot.slane %v141, %v147
  %vm149 = vcmp.eq.s32.totalorder %v144, %v148
  %v150 = vsel %vm149, %v139, 0.0
  %v151 = vld [vmem:[#allocation2] sm:$0xff]
  %vm152 = vcmask 64512
  %v154 = vsel %vm152, %v150, 0
  %156 = vmatprep.subr.mxu0 0.0
  %157 = vmatpush1.msra.mxu0 1.0
  %158 = vmatprep.subr.mxu0 0.0
  %159 = vmatpush1.msra.mxu0 0.0
  %160 = vmatprep.subr.mxu0 0.0
  %161 = vmatpush1.msra.mxu0 0.0
  %162 = vmatprep.subr.mxu0 0.0
  %163 = vmatpush1.msra.mxu0 0.0
  %164 = vmatprep.subr.mxu0 0.0
  %165 = vmatpush1.msra.mxu0 0.0
  %166 = vmatprep.subr.mxu0 0.0
  %167 = vmatpush1.msra.mxu0 0.0
  %168 = vmatprep.subr.mxu0 0.0
  %169 = vmatpush1.msra.mxu0 0.0
  %170 = vmatprep.subr.mxu0 0.0
  %171 = vmatpush1.msra.mxu0 0.0
  %172 = vmatprep.subr.mxu0 0.0
  %173 = vmatpush1.msra.mxu0 0.0
  %174 = vmatprep.subr.mxu0 0.0
  %175 = vmatpush1.msra.mxu0 0.0
  %176 = vmatprep.subr.mxu0 0.0
  %177 = vmatpush1.msra.mxu0 0.0
  %178 = vmatprep.subr.mxu0 0.0
  %179 = vmatpush1.msra.mxu0 0.0
  %180 = vmatprep.subr.mxu0 0.0
  %181 = vmatpush1.msra.mxu0 0.0
  %182 = vmatprep.subr.mxu0 0.0
  %183 = vmatpush1.msra.mxu0 0.0
  %184 = vmatprep.subr.mxu0 0.0
  %185 = vmatpush1.msra.mxu0 0.0
  %186 = vmatprep.subr.mxu0 0.0
  %187 = vmatpush1.msra.mxu0 0.0
  %188 = vmatprep.subr.mxu0 0.0
  %189 = vmatpush1.msra.mxu0 0.0
  %190 = vmatprep.subr.mxu0 0.0
  %191 = vmatpush1.msra.mxu0 0.0
  %192 = vmatprep.subr.mxu0 0.0
  %193 = vmatpush1.msra.mxu0 0.0
  %194 = vmatprep.subr.mxu0 0.0
  %195 = vmatpush1.msra.mxu0 0.0
  %196 = vmatprep.subr.mxu0 0.0
  %197 = vmatpush1.msra.mxu0 0.0
  %198 = vmatprep.subr.mxu0 0.0
  %199 = vmatpush1.msra.mxu0 0.0
  %200 = vmatprep.subr.mxu0 0.0
  %201 = vmatpush1.msra.mxu0 0.0
  %202 = vmatprep.subr.mxu0 0.0
  %203 = vmatpush1.msra.mxu0 0.0
  %204 = vmatprep.subr.mxu0 0.0
  %205 = vmatpush1.msra.mxu0 0.0
  %206 = vmatprep.subr.mxu0 0.0
  %207 = vmatpush1.msra.mxu0 0.0
  %208 = vmatprep.subr.mxu0 0.0
  %209 = vmatpush1.msra.mxu0 0.0
  %210 = vmatprep.subr.mxu0 0.0
  %211 = vmatpush1.msra.mxu0 0.0
  %212 = vmatprep.subr.mxu0 0.0
  %213 = vmatpush1.msra.mxu0 0.0
  %214 = vmatprep.subr.mxu0 0.0
  %215 = vmatpush1.msra.mxu0 0.0
  %216 = vmatprep.subr.mxu0 0.0
  %217 = vmatpush1.msra.mxu0 0.0
  %218 = vmatprep.subr.mxu0 0.0
  %219 = vmatpush1.msra.mxu0 0.0
  %220 = vmatprep.mubr.f32.mxu0 0.0
  %221 = vmatmul.mubr.f32.gmra.mrb[0].mxu0 %v154
  %v222 = vpop.f32.mrb[0].mxu0
  %v223 = vadd.f32 0.0, %v222
  %v224 = vpop.f32.mrb[0].mxu0
  %225 = vdwg.mxu0
  %v226 = vadd.f32 %v151, %v223
  %vm227 = vcmask 7168
  %228 = vst.msk [vmem:[#allocation2] sm:$0xff] %vm227, %v226
  %v229 = vld [vmem:[#allocation3] sm:$0xff]
  %v231 = vsel %vm152, %v139, 0
  %233 = vmatprep.subr.mxu0 0.0
  %234 = vmatpush1.msra.mxu0 1.0
  %235 = vmatprep.subr.mxu0 0.0
  %236 = vmatpush1.msra.mxu0 0.0
  %237 = vmatprep.subr.mxu0 0.0
  %238 = vmatpush1.msra.mxu0 0.0
  %239 = vmatprep.subr.mxu0 0.0
  %240 = vmatpush1.msra.mxu0 0.0
  %241 = vmatprep.subr.mxu0 0.0
  %242 = vmatpush1.msra.mxu0 0.0
  %243 = vmatprep.subr.mxu0 0.0
  %244 = vmatpush1.msra.mxu0 0.0
  %245 = vmatprep.subr.mxu0 0.0
  %246 = vmatpush1.msra.mxu0 0.0
  %247 = vmatprep.subr.mxu0 0.0
  %248 = vmatpush1.msra.mxu0 0.0
  %249 = vmatprep.subr.mxu0 0.0
  %250 = vmatpush1.msra.mxu0 0.0
  %251 = vmatprep.subr.mxu0 0.0
  %252 = vmatpush1.msra.mxu0 0.0
  %253 = vmatprep.subr.mxu0 0.0
  %254 = vmatpush1.msra.mxu0 0.0
  %255 = vmatprep.subr.mxu0 0.0
  %256 = vmatpush1.msra.mxu0 0.0
  %257 = vmatprep.subr.mxu0 0.0
  %258 = vmatpush1.msra.mxu0 0.0
  %259 = vmatprep.subr.mxu0 0.0
  %260 = vmatpush1.msra.mxu0 0.0
  %261 = vmatprep.subr.mxu0 0.0
  %262 = vmatpush1.msra.mxu0 0.0
  %263 = vmatprep.subr.mxu0 0.0
  %264 = vmatpush1.msra.mxu0 0.0
  %265 = vmatprep.subr.mxu0 0.0
  %266 = vmatpush1.msra.mxu0 0.0
  %267 = vmatprep.subr.mxu0 0.0
  %268 = vmatpush1.msra.mxu0 0.0
  %269 = vmatprep.subr.mxu0 0.0
  %270 = vmatpush1.msra.mxu0 0.0
  %271 = vmatprep.subr.mxu0 0.0
  %272 = vmatpush1.msra.mxu0 0.0
  %273 = vmatprep.subr.mxu0 0.0
  %274 = vmatpush1.msra.mxu0 0.0
  %275 = vmatprep.subr.mxu0 0.0
  %276 = vmatpush1.msra.mxu0 0.0
  %277 = vmatprep.subr.mxu0 0.0
  %278 = vmatpush1.msra.mxu0 0.0
  %279 = vmatprep.subr.mxu0 0.0
  %280 = vmatpush1.msra.mxu0 0.0
  %281 = vmatprep.subr.mxu0 0.0
  %282 = vmatpush1.msra.mxu0 0.0
  %283 = vmatprep.subr.mxu0 0.0
  %284 = vmatpush1.msra.mxu0 0.0
  %285 = vmatprep.subr.mxu0 0.0
  %286 = vmatpush1.msra.mxu0 0.0
  %287 = vmatprep.subr.mxu0 0.0
  %288 = vmatpush1.msra.mxu0 0.0
  %289 = vmatprep.subr.mxu0 0.0
  %290 = vmatpush1.msra.mxu0 0.0
  %291 = vmatprep.subr.mxu0 0.0
  %292 = vmatpush1.msra.mxu0 0.0
  %293 = vmatprep.subr.mxu0 0.0
  %294 = vmatpush1.msra.mxu0 0.0
  %295 = vmatprep.subr.mxu0 0.0
  %296 = vmatpush1.msra.mxu0 0.0
  %297 = vmatprep.mubr.f32.mxu0 0.0
  %298 = vmatmul.mubr.f32.gmra.mrb[0].mxu0 %v231
  %v299 = vpop.f32.mrb[0].mxu0
  %v300 = vadd.f32 0.0, %v299
  %v301 = vpop.f32.mrb[0].mxu0
  %302 = vdwg.mxu0
  %v303 = vadd.f32 %v229, %v300
  %304 = vst.msk [vmem:[#allocation3] sm:$0xff] %vm227, %v303
  %v305 = vld [vmem:[#allocation4] sm:$0xff]
  %v306 = vsel %vm149, %v139, inf
  %v307 = vsel %vm152, %v306, inf
  %308 = vmin.xlane.f32.xlu0 %v307
  %v309 = vpop.xlane.xlu0 %308
  %v310 = vmin.f32 %v305, %v309
  %311 = vst.msk [vmem:[#allocation4] sm:$0xff] %vm227, %v310
  %v312 = vld [vmem:[#allocation5] sm:$0xff]
  %v313 = vsel %vm152, %v150, -inf
  %314 = vmax.xlane.f32.xlu0 %v313
  %v315 = vpop.xlane.xlu0 %314
  %v316 = vmax.f32 %v312, %v315
  %317 = vst.msk [vmem:[#allocation5] sm:$0xff] %vm227, %v316
  %v318 = vld [vmem:[#allocation6] sm:$0xff]
  %v319 = vsel %vm149, inf, %v139
  %v320 = vsel %vm152, %v319, inf
  %321 = vmin.xlane.f32.xlu0 %v320
  %v322 = vpop.xlane.xlu0 %321
  %v323 = vmin.f32 %v318, %v322
  %324 = vst.msk [vmem:[#allocation6] sm:$0xff] %vm227, %v323
  // Predicated region
  $region34: #{tpu_custom_call.1} parent=0 // pred_check
    %p325 = pneg %p26
  $region35: #{tpu_custom_call.1} parent=0 // pred_check_branch
    %327 = sbr.rel (%p325) target = $region37
  $region36: #{tpu_custom_call.1} parent=0 // pred_region
    %v328 = vld [vmem:[%s4] sm:$0xff]
    %v329 = vsub.f32 8.0, %v328
    %v330 = vld [vmem:[#allocation2] sm:$0xff]
    %v331 = vld [vmem:[#allocation4] sm:$0xff]
    %v332 = vsub.f32 %v330, %v331
    %v333 = vsub.f32 %v328, 1.0
    %v334 = vrcp.pop %v333
    %v335 = vmul.f32 %v332, %v334
    %v336 = vld [vmem:[#allocation5] sm:$0xff]
    %v337 = vrcp.pop %v335
    %v338 = vmul.f32 %v336, %v337
    %v339 = vlog2.pop %v335
    %v340 = vmul.f32 %v339, 0.6931472
    %v341 = vmul.f32 %v340, 0.5
    %v342 = vadd.f32 %v338, %v341
    %v343 = vld [vmem:[#allocation3] sm:$0xff]
    %v344 = vsub.f32 %v343, %v330
    %v345 = vrcp.pop %v329
    %v346 = vmul.f32 %v344, %v345
    %v347 = vld [vmem:[#allocation6] sm:$0xff]
    %v348 = vrcp.pop %v346
    %v349 = vmul.f32 %v347, %v348
    %v350 = vlog2.pop %v346
    %v351 = vmul.f32 %v350, 0.6931472
    %v352 = vmul.f32 %v351, 0.5
    %v353 = vadd.f32 %v349, %v352
    %v354 = vsub.f32 %v342, %v353
    %v355 = vadd.f32 %v354, 0.3
    %v356 = vmax.f32 %v355, 0.0
    %357 = vst.msk [vmem:[%s7] sm:$0xff] %vm227, %v356
  $region37: #{tpu_custom_call.1} parent=0 // pred_fallthru
    _
  // Predicated region
  $region38: #{tpu_custom_call.1} parent=0 // pred_check
    _
  $region39: #{tpu_custom_call.1} parent=0 // pred_check_branch
    %359 = sbr.rel (0) target = $region41
  $region40: #{tpu_custom_call.1} parent=0 // pred_region
    _
  $region41: #{tpu_custom_call.1} parent=0 // pred_fallthru
    _
  // Predicated region
  $region42: #{tpu_custom_call.1} parent=0 // pred_check
    _
  $region43: #{tpu_custom_call.1} parent=0 // pred_check_branch
    %361 = sbr.rel (0) target = $region45
  $region44: #{tpu_custom_call.1} parent=0 // pred_region
    _
  $region45: #{tpu_custom_call.1} parent=0 // pred_fallthru
    _

</llo_original>
